<compile_context>
chip_gen: v7x
topology: tpu7x:2x2x1
jax: 0.10.0
libtpu: 0.0.40
codegen_flags: <defaults>
</compile_context>

<pallas_src>
import jax
import jax.numpy as jnp
from jax import lax
from jax.experimental import pallas as pl
from jax.experimental.pallas import tpu as pltpu

LANE = 128


def _fbank_aug_kernel(p_ref, x_ref, o_ref):
    # p_ref: (bt, 1, 4) int32, columns = [tpos, tlen, fpos, flen].
    # x_ref / o_ref: (bt, F, tt) VMEM tiles; second grid axis tiles time.
    x = x_ref[...]
    bt, F, tt = x.shape

    # Global time offset of this block (time axis is tiled by the second grid
    # axis), lane iota for time, sublane iota for freq.
    t0 = pl.program_id(1) * tt
    t_idx = t0 + lax.broadcasted_iota(jnp.int32, (1, 1, tt), 2)   # (1, 1, tt)
    f_idx = lax.broadcasted_iota(jnp.int32, (1, F, 1), 1)         # (1, F, 1)

    p = p_ref[...]                 # (bt, 1, 4)
    tpos = p[:, :, 0:1]            # (bt, 1, 1)
    tlen = p[:, :, 1:2]
    fpos = p[:, :, 2:3]
    flen = p[:, :, 3:4]

    # PyTorch applies the time mask then the freq mask; both write zeros, so
    # the union of the two masks is semantically identical.
    time_mask = (t_idx >= tpos) & (t_idx < tpos + tlen)           # (bt, 1, tt)
    freq_mask = (f_idx >= fpos) & (f_idx < fpos + flen)           # (bt, F, 1)
    o_ref[...] = jnp.where(time_mask | freq_mask, jnp.zeros((), x.dtype), x)


def _hw_budgets():
    """(target block bytes, vmem_limit_bytes or None) per TPU generation."""
    try:
        kind = jax.devices()[0].device_kind.lower()
    except Exception:
        kind = ""
    if "v7" in kind:
        # 64 MiB physical VMEM per TC, 32 MiB scoped default: 6 MiB blocks,
        # double-buffered in+out = 24 MiB, raise limit but stay well under 64.
        return 6 << 20, 40 << 20
    if "v6" in kind:
        # 128 MiB physical, 32 MiB scoped default: 8 MiB blocks need a raise.
        return 8 << 20, 56 << 20
    if "v5" in kind and ("lite" in kind or "v5e" in kind):
        # 16 MiB scoped default: 3 MiB blocks (12 MiB buffered) stay inside it.
        return 3 << 20, None
    # v5p / v4 / unknown: conservative default that fits every scoped default.
    return 2 << 20, None


def _choose_tiles(B, F, T, itemsize, target_bytes):
    """Pick (batch tile, time tile) for block shape (bt, F, tt)."""
    # Time tile: full T when small; otherwise a 128-aligned chunk so every
    # block's lane extent is a multiple of 128 (unmasked vst stores).
    if T <= LANE:
        tt = T
    else:
        tt = min((T // LANE) * LANE, 2048)
        if tt >= T:
            tt = T
        # Keep even a single-row block under the byte budget (huge-F case).
        while F * tt * itemsize > target_bytes and tt > LANE and tt % (2 * LANE) == 0:
            tt //= 2

    per_row = max(F * tt * itemsize, 1)
    bt = int(max(1, min(B, target_bytes // per_row)))

    # Guarantee >= 4 grid steps (2 per v7x TensorCore, keeps double-buffered
    # pipelining on each core) whenever the problem is big enough to allow it.
    while pl.cdiv(B, bt) * pl.cdiv(T, tt) < 4 and bt > 1:
        bt = (bt + 1) // 2
    while (pl.cdiv(B, bt) * pl.cdiv(T, tt) < 4
           and tt > LANE and tt % (2 * LANE) == 0):
        tt //= 2
    return bt, tt


def fbank_aug(x, tpos, tlen, fpos, flen):
    """x: (B, F, T) float array; tpos/tlen/fpos/flen: (B,) int32."""
    B, F, T = x.shape
    itemsize = jnp.dtype(x.dtype).itemsize
    target_bytes, vmem_limit = _hw_budgets()
    bt, tt = _choose_tiles(B, F, T, itemsize, target_bytes)
    grid = (pl.cdiv(B, bt), pl.cdiv(T, tt))

    # Pack the four per-batch scalars into one (B, 1, 4) int32 array -> a
    # single small param DMA per grid step.
    params = jnp.stack(
        [jnp.asarray(a, jnp.int32).reshape(B) for a in (tpos, tlen, fpos, flen)],
        axis=-1,
    ).reshape(B, 1, 4)

    p_spec = pl.BlockSpec((bt, 1, 4), lambda i, j: (i, 0, 0))
    x_spec = pl.BlockSpec((bt, F, tt), lambda i, j: (i, 0, j))

    cp_kwargs = dict(dimension_semantics=("parallel", "parallel"))
    if vmem_limit is not None:
        cp_kwargs["vmem_limit_bytes"] = int(vmem_limit)

    return pl.pallas_call(
        _fbank_aug_kernel,
        out_shape=jax.ShapeDtypeStruct((B, F, T), x.dtype),
        grid_spec=pltpu.PrefetchScalarGridSpec(
            num_scalar_prefetch=0,
            grid=grid,
            in_specs=[p_spec, x_spec],
            out_specs=x_spec,
        ),
        compiler_params=pltpu.CompilerParams(**cp_kwargs),
    )(params, x)


def make_mask_params(key, B, F, T,
                     freq_mask_width=(0, 8), time_mask_width=(0, 10)):
    """Mirrors the torch.randint calls in FbankAug.mask_along_axis."""
    k1, k2, k3, k4 = jax.random.split(key, 4)
    # time mask (axis=2)
    tlen = jax.random.randint(k1, (B,), time_mask_width[0], time_mask_width[1],
                              dtype=jnp.int32)
    t_high = jnp.maximum(1, T - jnp.max(tlen))
    tpos = jax.random.randint(k2, (B,), 0, t_high, dtype=jnp.int32)
    # freq mask (axis=1)
    flen = jax.random.randint(k3, (B,), freq_mask_width[0], freq_mask_width[1],
                              dtype=jnp.int32)
    f_high = jnp.maximum(1, F - jnp.max(flen))
    fpos = jax.random.randint(k4, (B,), 0, f_high, dtype=jnp.int32)
    return tpos, tlen, fpos, flen


def reference(x, tpos, tlen, fpos, flen):
    B, F, T = x.shape
    t_idx = jnp.arange(T)[None, None, :]
    f_idx = jnp.arange(F)[None, :, None]
    time_mask = (t_idx >= tpos[:, None, None]) & (t_idx < (tpos + tlen)[:, None, None])
    freq_mask = (f_idx >= fpos[:, None, None]) & (f_idx < (fpos + flen)[:, None, None])
    return jnp.where(time_mask | freq_mask, 0.0, x)


if __name__ == "__main__":
    # Small (batch, features, times); T = 128 so stores are lane-dense.
    B, F, T = 4, 16, 128
    key = jax.random.PRNGKey(0)
    kx, km = jax.random.split(key)
    x = jax.random.normal(kx, (B, F, T), dtype=jnp.float32)
    tpos, tlen, fpos, flen = make_mask_params(km, B, F, T)

    out = fbank_aug(x, tpos, tlen, fpos, flen)
    out = jax.block_until_ready(out)

    ref = reference(x, tpos, tlen, fpos, flen)
    assert out.shape == x.shape and out.dtype == x.dtype
    assert jnp.allclose(out, ref), "mismatch vs reference"
    print("KERNEL_OK")
</pallas_src>

<mosaic_0001>
module attributes {stable_mosaic.version = 11 : i64} {
  func.func @_fbank_aug_kernel(%arg0: i32, %arg1: i32, %arg2: memref<1x1x4xi32, #tpu.memory_space<vmem>>, %arg3: memref<1x16x128xf32, #tpu.memory_space<vmem>>, %arg4: memref<1x16x128xf32, #tpu.memory_space<vmem>>) attributes {dimension_semantics = [#tpu.dimension_semantics<parallel>, #tpu.dimension_semantics<parallel>], iteration_bounds = array<i64: 4, 1>, scalar_prefetch = 0 : i64, scratch_operands = 0 : i64, tpu.core_type = #tpu.core_type<tc>, window_params = [{transform_indices = @transform_0, window_bounds = array<i64: 1, 1, 4>}, {transform_indices = @transform_1, window_bounds = array<i64: 1, 16, 128>}, {transform_indices = @transform_2, window_bounds = array<i64: 1, 16, 128>}]} {
    %c0 = arith.constant 0 : index
    %c0_0 = arith.constant 0 : index
    %c0_1 = arith.constant 0 : index
    %0 = vector.load %arg3[%c0, %c0_0, %c0_1] : memref<1x16x128xf32, #tpu.memory_space<vmem>>, vector<1x16x128xf32>
    %c128_i32 = arith.constant 128 : i32
    %1 = arith.muli %arg1, %c128_i32 : i32
    %2 = tpu.iota {dimensions = array<i32: 2>} : vector<1x1x128xi32>
    %3 = vector.broadcast %1 : i32 to vector<1x1x128xi32>
    %4 = arith.addi %3, %2 : vector<1x1x128xi32>
    %5 = tpu.iota {dimensions = array<i32: 1>} : vector<1x16x1xi32>
    %c0_2 = arith.constant 0 : index
    %c0_3 = arith.constant 0 : index
    %c0_4 = arith.constant 0 : index
    %6 = vector.load %arg2[%c0_2, %c0_3, %c0_4] : memref<1x1x4xi32, #tpu.memory_space<vmem>>, vector<1x1x4xi32>
    %7 = vector.extract_strided_slice %6 {offsets = [0, 0, 0], sizes = [1, 1, 1], strides = [1, 1, 1]} : vector<1x1x4xi32> to vector<1x1x1xi32>
    %8 = vector.extract_strided_slice %6 {offsets = [0, 0, 1], sizes = [1, 1, 1], strides = [1, 1, 1]} : vector<1x1x4xi32> to vector<1x1x1xi32>
    %9 = vector.extract_strided_slice %6 {offsets = [0, 0, 2], sizes = [1, 1, 1], strides = [1, 1, 1]} : vector<1x1x4xi32> to vector<1x1x1xi32>
    %10 = vector.extract_strided_slice %6 {offsets = [0, 0, 3], sizes = [1, 1, 1], strides = [1, 1, 1]} : vector<1x1x4xi32> to vector<1x1x1xi32>
    %11 = vector.broadcast %7 : vector<1x1x1xi32> to vector<1x1x128xi32>
    %12 = arith.cmpi sge, %4, %11 : vector<1x1x128xi32>
    %13 = arith.addi %7, %8 : vector<1x1x1xi32>
    %14 = vector.broadcast %13 : vector<1x1x1xi32> to vector<1x1x128xi32>
    %15 = arith.cmpi slt, %4, %14 : vector<1x1x128xi32>
    %16 = arith.andi %12, %15 : vector<1x1x128xi1>
    %17 = vector.broadcast %9 : vector<1x1x1xi32> to vector<1x16x1xi32>
    %18 = arith.cmpi sge, %5, %17 : vector<1x16x1xi32>
    %19 = arith.addi %9, %10 : vector<1x1x1xi32>
    %20 = vector.broadcast %19 : vector<1x1x1xi32> to vector<1x16x1xi32>
    %21 = arith.cmpi slt, %5, %20 : vector<1x16x1xi32>
    %22 = arith.andi %18, %21 : vector<1x16x1xi1>
    %23 = vector.broadcast %16 : vector<1x1x128xi1> to vector<1x16x128xi1>
    %24 = vector.broadcast %22 : vector<1x16x1xi1> to vector<1x16x128xi1>
    %25 = arith.ori %23, %24 : vector<1x16x128xi1>
    %cst = arith.constant 0.000000e+00 : f32
    %26 = vector.broadcast %cst : f32 to vector<1x16x128xf32>
    %27 = arith.select %25, %26, %0 : vector<1x16x128xi1>, vector<1x16x128xf32>
    %c0_5 = arith.constant 0 : index
    %c0_6 = arith.constant 0 : index
    %c0_7 = arith.constant 0 : index
    %28 = vector.load %arg4[%c0_5, %c0_6, %c0_7] : memref<1x16x128xf32, #tpu.memory_space<vmem>>, vector<1x16x128xf32>
    tpu.vector_store %arg4[%c0_5, %c0_6, %c0_7], %27 {strides = array<i32>} : memref<1x16x128xf32, #tpu.memory_space<vmem>>, vector<1x16x128xf32>,
    return
  }
  func.func @transform_0(%arg0: i32, %arg1: i32) -> (i32, i32, i32) {
    %c0_i32 = arith.constant 0 : i32
    %c0_i32_0 = arith.constant 0 : i32
    %c0_i32_1 = arith.constant 0 : i32
    return %arg0, %c0_i32, %c0_i32_0 : i32, i32, i32
  }
  func.func @transform_1(%arg0: i32, %arg1: i32) -> (i32, i32, i32) {
    %c0_i32 = arith.constant 0 : i32
    %c0_i32_0 = arith.constant 0 : i32
    return %arg0, %c0_i32, %arg1 : i32, i32, i32
  }
  func.func @transform_2(%arg0: i32, %arg1: i32) -> (i32, i32, i32) {
    %c0_i32 = arith.constant 0 : i32
    %c0_i32_0 = arith.constant 0 : i32
    return %arg0, %c0_i32, %arg1 : i32, i32, i32
  }
}

</mosaic_0001>

<llo_original>
// kernel: tpu_custom_call.1
$region0: #{tpu_custom_call.1}
  #allocation0 [shape = 'u32[]', space=smem, size = 0x4, offset = 0x4, fixed_abs, tag = 'smem constant byte address 0x4 - core index']
  #allocation1 [shape = 'u32[144,128]{1,0:T(1,128)}', space=vmem, size = 0x12000, scoped, tag = 'internal scratch']
  %s0 = inlined_call_operand.hbm [shape: s32[4,1,4], index: 0, kind: input, shape index: {}]
  %s1 = inlined_call_operand.hbm [shape: f32[4,16,128], index: 1, kind: input, shape index: {}]
  %s2 = inlined_call_operand.hbm [shape: f32[4,16,128], index: 2, kind: output, shape index: {}]
  %s3 = sld [smem:[#allocation0]]
  $region49: #{tpu_custom_call.1} parent=0
    _
  %s5 = ssub.s32 1, %s3
  %s6 = scalar_select 0, %s5, %s3
  $region1: #{tpu_custom_call.1} parent=0
    #allocation2 [shape = 'u8[1024]{0}', space=vmem, size = 0x400, scoped, tag = 'input window, operand 0']
    #allocation3 [shape = 's32[2]{0}', space=sflag, size = 0x8, scoped, tag = 'scoped memory for tpu_custom_call.1']
    #allocation4 [shape = 's32[2]{0}', space=sflag, size = 0x8, scoped, tag = 'scoped memory for tpu_custom_call.1']
    #allocation5 [shape = 'u8[16384]{0}', space=vmem, size = 0x4000, scoped, tag = 'input window, operand 1']
    #allocation6 [shape = 's32[2]{0}', space=sflag, size = 0x8, scoped, tag = 'scoped memory for tpu_custom_call.1']
    #allocation7 [shape = 'u8[16384]{0}', space=vmem, size = 0x4000, scoped, tag = 'output window, operand 0']
    %7 = vsyncpa [#allocation3], 0
    %s8 = scalar_lea.sflag [#allocation3], 1
    %9 = vsyncpa %s8, 0
    %10 = vsyncpa [#allocation6], 0
    %s11 = scalar_lea.sflag [#allocation6], 1
    %12 = vsyncpa %s11, 0
    %13 = vsyncpa [#allocation4], 0
    %s14 = scalar_lea.sflag [#allocation4], 1
    %15 = vsyncpa %s14, 0
    loop: start=0, step=1, limit=6
    $region2: #{tpu_custom_call.1} parent=1 // loop_pre_header
      _
    $region3: #{tpu_custom_call.1} parent=1 // loop_header
      %s17 = sphi 0, %s21
      %p18 = scmp.ge.s32.totalorder %s17, 6
      %s24 = sphi 0, %s36
      %s25 = sphi 0, %s32
      %s26 = sphi 0, %s24
      %s27 = sphi 0, %s25
      %s28 = sphi 0, %s26
      %s29 = sphi 0, %s27
      %s39 = sphi 0, %s41
      %s42 = sphi 0, %s39
      %s43 = sphi 0, %s42
      %s59 = sphi 0, %s43
      %s67 = sphi 0, %s69
      %s70 = sphi 0, %s67
      %s71 = sphi 0, %s70
      %s87 = sphi 0, %s71
      %s95 = sphi 0, %s97
      %s98 = sphi 0, %s95
      %s99 = sphi 0, %s98
      %s115 = sphi 0, %s99
    $region4: #{tpu_custom_call.1} parent=1 // loop_header_branch
      %20 = sbr.rel (%p18) target = $region8
    $region5: #{tpu_custom_call.1} parent=1 // loop_body
      %s22 = ssub.s32 %s17, 1
      %s23 = ssub.s32 %s17, 2
      %s30 = sadd.s32 1, %s25
      %p31 = scmp.ge.s32.totalorder %s30, 1
      %s32 = scalar_select %p31, 0, %s30
      %s33 = sadd.s32 1, %s24
      %s34 = scalar_select %p31, %s33, %s24
      %p35 = scmp.ge.s32.totalorder %s34, 4
      %s36 = scalar_select %p35, 0, %s34
      %s37 = ssub.s32 %s24, %s36
      %p38 = scmp.eq.s32.totalorder %s37, 0
      %s40 = sadd.s32 %s39, 1
      %s41 = scalar_select %p38, %s39, %s40
      %p44 = pneg %p38
      %p45 = scmp.eq.s32.totalorder %s17, 3
      %p46 = por %p44, %p45
      %p47 = scmp.ne.s32.totalorder %s39, %s42
      %p48 = scmp.eq.s32.totalorder %s17, 0
      %p49 = por %p47, %p48
      %p50 = scmp.ne.s32.totalorder %s39, %s42
      %p51 = scmp.eq.s32.totalorder %s22, 3
      %p52 = por %p50, %p51
      %p53 = scmp.ne.s32.totalorder %s42, %s43
      %p54 = scmp.eq.s32.totalorder %s22, 0
      %p55 = por %p53, %p54
      %p56 = scmp.ne.s32.totalorder %s42, %s43
      %p57 = scmp.eq.s32.totalorder %s23, 3
      %p58 = por %p56, %p57
      %p60 = scmp.ne.s32.totalorder %s43, %s59
      %p61 = scmp.eq.s32.totalorder %s23, 0
      %p62 = por %p60, %p61
      %s63 = ssub.s32 %s24, %s36
      %s64 = ssub.s32 %s25, %s32
      %s65 = sor.u32 %s63, %s64
      %p66 = scmp.eq.s32.totalorder %s65, 0
      %s68 = sadd.s32 %s67, 1
      %s69 = scalar_select %p66, %s67, %s68
      %p72 = pneg %p66
      %p73 = scmp.eq.s32.totalorder %s17, 3
      %p74 = por %p72, %p73
      %p75 = scmp.ne.s32.totalorder %s67, %s70
      %p76 = scmp.eq.s32.totalorder %s17, 0
      %p77 = por %p75, %p76
      %p78 = scmp.ne.s32.totalorder %s67, %s70
      %p79 = scmp.eq.s32.totalorder %s22, 3
      %p80 = por %p78, %p79
      %p81 = scmp.ne.s32.totalorder %s70, %s71
      %p82 = scmp.eq.s32.totalorder %s22, 0
      %p83 = por %p81, %p82
      %p84 = scmp.ne.s32.totalorder %s70, %s71
      %p85 = scmp.eq.s32.totalorder %s23, 3
      %p86 = por %p84, %p85
      %p88 = scmp.ne.s32.totalorder %s71, %s87
      %p89 = scmp.eq.s32.totalorder %s23, 0
      %p90 = por %p88, %p89
      %s91 = ssub.s32 %s24, %s36
      %s92 = ssub.s32 %s25, %s32
      %s93 = sor.u32 %s91, %s92
      %p94 = scmp.eq.s32.totalorder %s93, 0
      %s96 = sadd.s32 %s95, 1
      %s97 = scalar_select %p94, %s95, %s96
      %p100 = pneg %p94
      %p101 = scmp.eq.s32.totalorder %s17, 3
      %p102 = por %p100, %p101
      %p103 = scmp.ne.s32.totalorder %s95, %s98
      %p104 = scmp.eq.s32.totalorder %s17, 0
      %p105 = por %p103, %p104
      %p106 = scmp.ne.s32.totalorder %s95, %s98
      %p107 = scmp.eq.s32.totalorder %s22, 3
      %p108 = por %p106, %p107
      %p109 = scmp.ne.s32.totalorder %s98, %s99
      %p110 = scmp.eq.s32.totalorder %s22, 0
      %p111 = por %p109, %p110
      %p112 = scmp.ne.s32.totalorder %s98, %s99
      %p113 = scmp.eq.s32.totalorder %s23, 3
      %p114 = por %p112, %p113
      %p116 = scmp.ne.s32.totalorder %s99, %s115
      %p117 = scmp.eq.s32.totalorder %s23, 0
      %p118 = por %p116, %p117
      %p119 = scmp.le.s32.totalorder 1, %s17
      %p120 = scmp.lt.s32.totalorder %s17, 5
      %p121 = pnand %p119, %p120
      %p122 = pneg %p121
      // Predicated region
      $region9: #{tpu_custom_call.1} parent=5 // pred_check
        _
      $region10: #{tpu_custom_call.1} parent=5 // pred_check_branch
        %124 = sbr.rel (%p121) target = $region12
      $region11: #{tpu_custom_call.1} parent=5 // pred_region
        %s125 = ssub.s32 %s17, 1
      $region12: #{tpu_custom_call.1} parent=5 // pred_fallthru
        _
      %p126 = scmp.lt.s32.totalorder %s17, 4
      // Predicated region
      $region13: #{tpu_custom_call.1} parent=5 // pred_check
        %p127 = pneg %p126
      $region14: #{tpu_custom_call.1} parent=5 // pred_check_branch
        %129 = sbr.rel (%p127) target = $region16
      $region15: #{tpu_custom_call.1} parent=5 // pred_region
        // Predicated region
        $region17: #{tpu_custom_call.1} parent=15 // pred_check
          %p130 = pneg %p49
        $region18: #{tpu_custom_call.1} parent=15 // pred_check_branch
          %132 = sbr.rel (%p130) target = $region20
        $region19: #{tpu_custom_call.1} parent=15 // pred_region
          %s133 = sand.u32 %s39, 1
          %s134 = scalar_lea.sflag [#allocation3], %s133
          %s135 = sand.u32 %s39, 1
          %s136 = scalar_lea.vmem [#allocation2], %s135
          %s138 = ssub.s32 16, 16
          %139 = vsyncadd %s134, %s138
          %s140 = smul.addr %s24, 16
          %s141 = scalar_lea.hbm %s0, %s140
          %s143 = sshll.u32 %s136, 4
          %s144 = int_to_ptr.vmem [resolvable:$true] %s143
          %146 = dma.hbm_to_vmem [thread:$0]  %s141, 16, %s144, %s134
        $region20: #{tpu_custom_call.1} parent=15 // pred_fallthru
          _
        // Predicated region
        $region21: #{tpu_custom_call.1} parent=15 // pred_check
          %p147 = pneg %p77
        $region22: #{tpu_custom_call.1} parent=15 // pred_check_branch
          %149 = sbr.rel (%p147) target = $region24
        $region23: #{tpu_custom_call.1} parent=15 // pred_region
          %s150 = sand.u32 %s67, 1
          %s151 = scalar_lea.sflag [#allocation6], %s150
          %s152 = sand.u32 %s67, 1
          %s153 = smul.addr %s152, 16
          %s154 = scalar_lea.vmem [#allocation5], %s153
          %s156 = ssub.s32 256, 256
          %157 = vsyncadd %s151, %s156
          %s158 = smul.addr %s24, 2
          %s159 = sadd.s32 %s25, %s158
          %s160 = smul.addr %s159, 128
          %s161 = scalar_lea.hbm %s1, %s160
          %s162 = sshll.u32 %s154, 4
          %s163 = int_to_ptr.vmem [resolvable:$true] %s162
          %168 = dma.hbm_to_vmem [thread:$0]  %s161, 256, %s163, %s151, 128, 128, 8
        $region24: #{tpu_custom_call.1} parent=15 // pred_fallthru
          _
      $region16: #{tpu_custom_call.1} parent=5 // pred_fallthru
        _
      %p169 = scmp.le.s32.totalorder 1, %s17
      %p170 = scmp.lt.s32.totalorder %s17, 5
      %p171 = pnand %p169, %p170
      %p172 = pneg %p171
      // Predicated region
      $region25: #{tpu_custom_call.1} parent=5 // pred_check
        _
      $region26: #{tpu_custom_call.1} parent=5 // pred_check_branch
        %174 = sbr.rel (%p171) target = $region28
      $region27: #{tpu_custom_call.1} parent=5 // pred_region
        %s175 = ssub.s32 %s17, 1
        %s176 = sand.u32 %s42, 1
        %s177 = scalar_lea.sflag [#allocation3], %s176
        %s178 = sand.u32 %s42, 1
        %s179 = scalar_lea.vmem [#allocation2], %s178
        // Predicated region
        $region29: #{tpu_custom_call.1} parent=27 // pred_check
          %p180 = pneg %p55
        $region30: #{tpu_custom_call.1} parent=27 // pred_check_branch
          %182 = sbr.rel (%p180) target = $region32
        $region31: #{tpu_custom_call.1} parent=27 // pred_region
          %183 = dma.done %s177, 16
        $region32: #{tpu_custom_call.1} parent=27 // pred_fallthru
          _
        %s184 = sand.u32 %s70, 1
        %s185 = scalar_lea.sflag [#allocation6], %s184
        %s186 = sand.u32 %s70, 1
        %s187 = smul.addr %s186, 16
        %s188 = scalar_lea.vmem [#allocation5], %s187
        // Predicated region
        $region33: #{tpu_custom_call.1} parent=27 // pred_check
          %p189 = pneg %p83
        $region34: #{tpu_custom_call.1} parent=27 // pred_check_branch
          %191 = sbr.rel (%p189) target = $region36
        $region35: #{tpu_custom_call.1} parent=27 // pred_region
          %192 = dma.done %s185, 256
        $region36: #{tpu_custom_call.1} parent=27 // pred_fallthru
          _
        %s193 = sand.u32 %s42, 1
        %s194 = scalar_lea.sflag [#allocation3], %s193
        %s195 = sand.u32 %s42, 1
        %s196 = scalar_lea.vmem [#allocation2], %s195
        %p197 = pneg %p55
        %p198 = pneg %p52
        %s199 = sand.u32 %s70, 1
        %s200 = scalar_lea.sflag [#allocation6], %s199
        %s201 = sand.u32 %s70, 1
        %s202 = smul.addr %s201, 16
        %s203 = scalar_lea.vmem [#allocation5], %s202
        %p204 = pneg %p83
        %p205 = pneg %p80
        %p206 = pneg %p111
        %p207 = pneg %p108
        %s208 = sand.u32 %s98, 1
        %s209 = scalar_lea.sflag [#allocation4], %s208
        %s210 = sand.u32 %s98, 1
        %s211 = smul.addr %s210, 16
        %s212 = scalar_lea.vmem [#allocation7], %s211
        %v213 = vld [vmem:[%s188] sm:$0xff]
        %v214 = vld [vmem:[%s188 + $0x8] sm:$0xff]
        %s215 = smul.u32 %s27, 128
        %v216 = vlaneseq
        %v217 = vand.u32 %v216, 127
        %v218 = vstv %s215
        %v219 = vadd.s32 %v218, %v217
        %v220 = vlaneseq
        %v221 = vshrl.u32 %v220, 7
        %v222 = vadd.s32 %v221, 8
        %v223 = vld [vmem:[%s179] sm:$0x1]
        %224 = vset.pattern.permute.xlu0 0
        %225 = vperm.xlu0 %224, %v223
        %v226 = vpop.permute.xlu0 %225
        %v227 = vlaneseq
        %v228 = vshrl.u32 %v227, 7
        %v229 = vsub.s32 0, %v228
        %v230 = vrot.slane %v226, %v229
        %vm231 = vcmp.ge.s32.totalorder %v219, %v230
        %232 = vrot.lane.b32.xlu0 %v223, 127
        %v233 = vpop.permute.xlu0 %232
        %v234 = vadd.s32 %v223, %v233
        %235 = vset.pattern.permute.xlu0 0
        %236 = vperm.xlu0 %235, %v234
        %v237 = vpop.permute.xlu0 %236
        %v238 = vlaneseq
        %v239 = vshrl.u32 %v238, 7
        %v240 = vsub.s32 0, %v239
        %v241 = vrot.slane %v237, %v240
        %vm242 = vcmp.lt.s32.totalorder %v219, %v241
        %vm243 = vmand %vm231, %vm242
        %v244 = vlaneseq
        %v245 = vshrl.u32 %v244, 7
        %v246 = vsub.s32 0, %v245
        %v247 = vrot.slane %v223, %v246
        %vm248 = vcmp.ge.s32.totalorder %v221, %v247
        %vm249 = vcmp.ge.s32.totalorder %v222, %v247
        %v250 = vlaneseq
        %v251 = vshrl.u32 %v250, 7
        %v252 = vsub.s32 0, %v251
        %v253 = vrot.slane %v234, %v252
        %vm254 = vcmp.lt.s32.totalorder %v221, %v253
        %vm255 = vcmp.lt.s32.totalorder %v222, %v253
        %vm256 = vmand %vm248, %vm254
        %vm257 = vmand %vm249, %vm255
        %v258 = vsel %vm243, 1, 0
        %vm259 = vcmp.eq.s32.totalorder %v258, 1
        %v260 = vsel %vm256, 1, 0
        %v261 = vsel %vm257, 1, 0
        %262 = vset.pattern.permute.xlu0 2
        %263 = vperm.xlu0 %262, %v260
        %v264 = vpop.permute.xlu0 %263
        %265 = vset.pattern.permute.xlu0 2
        %266 = vperm.xlu0 %265, %v261
        %v267 = vpop.permute.xlu0 %266
        %vm268 = vcmp.eq.s32.totalorder %v264, 1
        %vm269 = vcmp.eq.s32.totalorder %v267, 1
        %vm270 = vmor %vm259, %vm268
        %vm271 = vmor %vm259, %vm269
        %v272 = vsel %vm270, 0.0, %v213
        %v273 = vsel %vm271, 0.0, %v214
        %274 = vst [vmem:[%s212] sm:$0xff] %v272
        %275 = vst [vmem:[%s212 + $0x8] sm:$0xff] %v273
        %s276 = sand.u32 %s98, 1
        %s277 = scalar_lea.sflag [#allocation4], %s276
        %s278 = sand.u32 %s98, 1
        %s279 = smul.addr %s278, 16
        %s280 = scalar_lea.vmem [#allocation7], %s279
        // Predicated region
        $region37: #{tpu_custom_call.1} parent=27 // pred_check
          %p281 = pneg %p108
        $region38: #{tpu_custom_call.1} parent=27 // pred_check_branch
          %283 = sbr.rel (%p281) target = $region40
        $region39: #{tpu_custom_call.1} parent=27 // pred_region
          %s285 = ssub.s32 256, 256
          %286 = vsyncadd %s277, %s285
          %s287 = smul.addr %s26, 2
          %s288 = sadd.s32 %s27, %s287
          %s289 = smul.addr %s288, 128
          %s290 = scalar_lea.hbm %s2, %s289
          %s291 = sshll.u32 %s280, 4
          %s292 = int_to_ptr.vmem [resolvable:$true] %s291
          %297 = dma.vmem_to_hbm [thread:$0]  %s292, 256, %s290, %s277, 128, 128, 8
        $region40: #{tpu_custom_call.1} parent=27 // pred_fallthru
          _
      $region28: #{tpu_custom_call.1} parent=5 // pred_fallthru
        _
      %p298 = scmp.le.s32.totalorder 2, %s17
      // Predicated region
      $region41: #{tpu_custom_call.1} parent=5 // pred_check
        %p299 = pneg %p298
      $region42: #{tpu_custom_call.1} parent=5 // pred_check_branch
        %301 = sbr.rel (%p299) target = $region44
      $region43: #{tpu_custom_call.1} parent=5 // pred_region
        %s302 = ssub.s32 %s17, 2
        // Predicated region
        $region45: #{tpu_custom_call.1} parent=43 // pred_check
          %p303 = pneg %p114
        $region46: #{tpu_custom_call.1} parent=43 // pred_check_branch
          %305 = sbr.rel (%p303) target = $region48
        $region47: #{tpu_custom_call.1} parent=43 // pred_region
          %s306 = sand.u32 %s99, 1
          %s307 = scalar_lea.sflag [#allocation4], %s306
          %s308 = sand.u32 %s99, 1
          %s309 = smul.addr %s308, 16
          %s310 = scalar_lea.vmem [#allocation7], %s309
          %311 = dma.done %s307, 256
        $region48: #{tpu_custom_call.1} parent=43 // pred_fallthru
          _
      $region44: #{tpu_custom_call.1} parent=5 // pred_fallthru
        _
    $region6: #{tpu_custom_call.1} parent=1 // loop_footer
      %s21 = sadd.s32 1, %s17
    $region7: #{tpu_custom_call.1} parent=1 // loop_footer_branch
      %16 = sbr.rel target = $region3
    $region8: #{tpu_custom_call.1} parent=1 // loop_exit
      _
    %312 = vsyncpa [#allocation3], 1
    %s313 = scalar_lea.sflag [#allocation3], 1
    %314 = vsyncpa %s313, 1
    %315 = vsyncpa [#allocation6], 1
    %s316 = scalar_lea.sflag [#allocation6], 1
    %317 = vsyncpa %s316, 1
    %318 = vsyncpa [#allocation4], 1
    %s319 = scalar_lea.sflag [#allocation4], 1
    %320 = vsyncpa %s319, 1

</llo_original>
